<compile_context>
chip_gen: v6e
topology: v6e:2x2x1
jax: 0.10.0
libtpu: 0.0.40
codegen_flags: <defaults>
</compile_context>

<pallas_src>
import jax
import jax.numpy as jnp
from jax import lax
from jax.experimental import pallas as pl
from jax.experimental.pallas import tpu as pltpu


def _skipgram_kernel(center_ref, target_ref, u_t_ref, logp_ref, m_ref, l_ref):
    """One (batch-tile, vocab-tile) grid step.

    center_ref : (tb, D)  f32        center embeddings (resident across V axis)
    target_ref : (tb, D)  f32        target embeddings (resident across V axis)
    u_t_ref    : (D, tv)  f32|bf16   streamed tile of transposed Emb_u
    logp_ref   : (tb, 1)  f32        per-row log-prob, written on last V step
    m_ref,l_ref: (tb, 1)  f32        online-logsumexp running max / sum
    """
    vi = pl.program_id(1)

    @pl.when(vi == 0)
    def _():
        m_ref[...] = jnp.full_like(m_ref, -jnp.inf)
        l_ref[...] = jnp.zeros_like(l_ref)

    c = center_ref[...]                                     # (tb, D) f32
    u = u_t_ref[...]                                        # (D, tv)

    # Canonical (M, K) x (K, N) MXU matmul, f32 accumulation.
    norm = lax.dot_general(
        c.astype(u.dtype), u, (((1,), (0,)), ((), ())),
        preferred_element_type=jnp.float32)                 # (tb, tv)

    # Online (flash-style) logsumexp over the vocabulary axis.
    m_prev = m_ref[...]
    m_new = jnp.maximum(m_prev, jnp.max(norm, axis=-1, keepdims=True))
    alpha = jnp.exp(m_prev - m_new)                         # 0 on first tile
    l_ref[...] = alpha * l_ref[...] + jnp.sum(jnp.exp(norm - m_new),
                                              axis=-1, keepdims=True)
    m_ref[...] = m_new

    @pl.when(vi == pl.num_programs(1) - 1)
    def _():
        t = target_ref[...]                                 # (tb, D) f32
        score = jnp.sum(t * c, axis=-1, keepdims=True)      # (tb, 1)
        lse = m_ref[...] + jnp.log(l_ref[...])              # (tb, 1)
        # log(exp(score)/sum(exp(norm))) == score - logsumexp(norm)
        logp_ref[...] = score - lse


def skipgram_nll(emb_v, emb_u, center_words, target_words, outer_words, *,
                 table_dtype=jnp.float32, tile_v=256, tile_b=128):
    """Forward pass of Skipgram. Returns the scalar NLL.

    Contract (matches the reference training loop): `outer_words` must
    enumerate the *full* vocabulary for every example, so
    outer_embeds[b] == Emb_u for each row.  The kernel therefore streams the
    (V, D) table directly instead of materializing the (B, V, D) gather.
    A negative-sampling / sub-vocab outer_words would need a different kernel.
    """
    B = center_words.shape[0]
    V, D = emb_u.shape
    assert outer_words.shape == (B, V), (
        "outer_words must be (batch, vocab_size) enumerating the full vocab")

    # --- tile selection ------------------------------------------------
    tb = tile_b
    B_pad = -(-B // tb) * tb
    n_bt = B_pad // tb

    tv = tile_v
    if V % tv != 0:
        for cand in (512, 256, 128):
            if V % cand == 0:
                tv = cand
                break
        else:
            tv = V
    n_vt = V // tv

    # --- tiny row gathers stay in plain JAX -----------------------------
    # TODO(synk): at training-loop scale, fuse these two (B, D) gathers into
    # the kernel via scalar-prefetched indices to save two HLO dispatches.
    center = emb_v[center_words[:, 0]].astype(jnp.float32)  # (B, D)
    target = emb_u[target_words[:, 0]].astype(jnp.float32)  # (B, D)
    if B_pad != B:
        pad = ((0, B_pad - B), (0, 0))
        center = jnp.pad(center, pad)
        target = jnp.pad(target, pad)

    # Pre-transposed table: (D, V) so the kernel matmul is (M,K) x (K,N).
    # (In a real training loop the table would simply be stored this way.)
    u_t = jnp.transpose(emb_u).astype(table_dtype)           # (D, V)

    table_bytes = jnp.dtype(table_dtype).itemsize
    cost = pl.CostEstimate(
        flops=2 * B_pad * D * V + 4 * B_pad * V + 2 * B_pad * D,
        transcendentals=B_pad * V + B_pad,
        bytes_accessed=D * V * table_bytes + 2 * B_pad * D * 4 + B_pad * 4,
    )

    logp = pl.pallas_call(
        _skipgram_kernel,
        out_shape=jax.ShapeDtypeStruct((B_pad, 1), jnp.float32),
        grid_spec=pltpu.PrefetchScalarGridSpec(
            num_scalar_prefetch=0,
            grid=(n_bt, n_vt),                       # reduction (V) axis last
            in_specs=[
                pl.BlockSpec((tb, D), lambda b, v: (b, 0)),   # center
                pl.BlockSpec((tb, D), lambda b, v: (b, 0)),   # target
                pl.BlockSpec((D, tv), lambda b, v: (0, v)),   # streamed table
            ],
            out_specs=pl.BlockSpec((tb, 1), lambda b, v: (b, 0)),
            scratch_shapes=[
                pltpu.VMEM((tb, 1), jnp.float32),    # running max
                pltpu.VMEM((tb, 1), jnp.float32),    # running sum
            ]),
        compiler_params=pltpu.CompilerParams(
            dimension_semantics=("parallel", "arbitrary"),
            vmem_limit_bytes=32 * 1024 * 1024),
        cost_estimate=cost,
    )(center, target, u_t)

    logp = logp[:B, 0]                               # drop batch padding
    return -jnp.mean(logp)


def skipgram_nll_ref(emb_v, emb_u, center_words, target_words, outer_words):
    """Pure-JAX reference mirroring the torch forward exactly."""
    center = emb_v[center_words[:, 0]]               # (B, D)
    target = emb_u[target_words[:, 0]]               # (B, D)
    outer = emb_u[outer_words]                       # (B, V, D)
    scores = jnp.sum(target * center, axis=-1)       # (B,)
    norm = jnp.einsum("bvd,bd->bv", outer, center,
                      preferred_element_type=jnp.float32)  # (B, V)
    return -jnp.mean(jnp.log(jnp.exp(scores) / jnp.sum(jnp.exp(norm), axis=1)))


if __name__ == "__main__":
    vocab_size = 512
    projection_dim = 128
    batch = 128          # fills the MXU M dim far better than the toy B=8

    key = jax.random.PRNGKey(0)
    k_v, k_u, k_c, k_t = jax.random.split(key, 4)

    # Module __init__: embedding_v ~ U(-1, 1); embedding_u is zero-initialized
    # in the torch code.  We use small uniform values for embedding_u so the
    # matmul / softmax path is numerically exercised (all-zero weights give a
    # trivial constant loss).
    embedding_v = jax.random.uniform(k_v, (vocab_size, projection_dim),
                                     jnp.float32, minval=-1.0, maxval=1.0)
    embedding_u = jax.random.uniform(k_u, (vocab_size, projection_dim),
                                     jnp.float32, minval=-0.5, maxval=0.5)

    center_words = jax.random.randint(k_c, (batch, 1), 0, vocab_size, jnp.int32)
    target_words = jax.random.randint(k_t, (batch, 1), 0, vocab_size, jnp.int32)
    # In the training script outer_words is the full vocabulary per example.
    outer_words = jnp.tile(jnp.arange(vocab_size, dtype=jnp.int32)[None, :],
                           (batch, 1))                      # (B, V)

    nll = jax.block_until_ready(
        skipgram_nll(embedding_v, embedding_u,
                     center_words, target_words, outer_words))
    nll_ref = jax.block_until_ready(
        skipgram_nll_ref(embedding_v, embedding_u,
                         center_words, target_words, outer_words))

    assert jnp.isfinite(nll), "kernel produced non-finite NLL"
    assert jnp.allclose(nll, nll_ref, rtol=1e-4, atol=1e-5), (nll, nll_ref)

    # bf16-streamed table variant (halves HBM bytes on the bound path);
    # f32 MXU accumulation, so only the table quantization differs.
    nll_bf16 = jax.block_until_ready(
        skipgram_nll(embedding_v, embedding_u,
                     center_words, target_words, outer_words,
                     table_dtype=jnp.bfloat16))
    assert jnp.isfinite(nll_bf16), "bf16 kernel produced non-finite NLL"
    assert jnp.allclose(nll_bf16, nll_ref, rtol=5e-2, atol=5e-2), (
        nll_bf16, nll_ref)

    print("KERNEL_OK")
</pallas_src>

<mosaic_0001>
module attributes {stable_mosaic.version = 11 : i64} {
  func.func @_skipgram_kernel(%arg0: i32, %arg1: i32, %arg2: memref<128x128xf32, #tpu.memory_space<vmem>>, %arg3: memref<128x128xf32, #tpu.memory_space<vmem>>, %arg4: memref<128x256xf32, #tpu.memory_space<vmem>>, %arg5: memref<128x1xf32, #tpu.memory_space<vmem>>, %arg6: memref<128x1xf32, #tpu.memory_space<vmem>>, %arg7: memref<128x1xf32, #tpu.memory_space<vmem>>) attributes {dimension_semantics = [#tpu.dimension_semantics<parallel>, #tpu.dimension_semantics<arbitrary>], iteration_bounds = array<i64: 1, 2>, scalar_prefetch = 0 : i64, scratch_operands = 2 : i64, tpu.core_type = #tpu.core_type<tc>, window_params = [{transform_indices = @transform_0, window_bounds = array<i64: 128, 128>}, {transform_indices = @transform_1, window_bounds = array<i64: 128, 128>}, {transform_indices = @transform_2, window_bounds = array<i64: 128, 256>}, {transform_indices = @transform_3, window_bounds = array<i64: 128, 1>}]} {
    %c0_i32 = arith.constant 0 : i32
    %0 = arith.cmpi eq, %arg1, %c0_i32 : i32
    %1 = arith.extui %0 : i1 to i32
    %c0_i32_0 = arith.constant 0 : i32
    %2 = arith.cmpi ne, %1, %c0_i32_0 : i32
    scf.if %2 {
      %cst_15 = arith.constant 0xFF800000 : f32
      %25 = vector.broadcast %cst_15 : f32 to vector<128x1xf32>
      %c0_16 = arith.constant 0 : index
      %c0_17 = arith.constant 0 : index
      %26 = vector.load %arg6[%c0_16, %c0_17] : memref<128x1xf32, #tpu.memory_space<vmem>>, vector<128x1xf32>
      tpu.vector_store %arg6[%c0_16, %c0_17], %25 {strides = array<i32>} : memref<128x1xf32, #tpu.memory_space<vmem>>, vector<128x1xf32>,
      %cst_18 = arith.constant 0.000000e+00 : f32
      %27 = vector.broadcast %cst_18 : f32 to vector<128x1xf32>
      %c0_19 = arith.constant 0 : index
      %c0_20 = arith.constant 0 : index
      %28 = vector.load %arg7[%c0_19, %c0_20] : memref<128x1xf32, #tpu.memory_space<vmem>>, vector<128x1xf32>
      tpu.vector_store %arg7[%c0_19, %c0_20], %27 {strides = array<i32>} : memref<128x1xf32, #tpu.memory_space<vmem>>, vector<128x1xf32>,
    } else {
    }
    %c0 = arith.constant 0 : index
    %c0_1 = arith.constant 0 : index
    %3 = vector.load %arg2[%c0, %c0_1] : memref<128x128xf32, #tpu.memory_space<vmem>>, vector<128x128xf32>
    %c0_2 = arith.constant 0 : index
    %c0_3 = arith.constant 0 : index
    %4 = vector.load %arg4[%c0_2, %c0_3] : memref<128x256xf32, #tpu.memory_space<vmem>>, vector<128x256xf32>
    %cst = arith.constant dense<0.000000e+00> : vector<128x256xf32>
    %5 = tpu.matmul %3, %4, %cst {dimension_numbers = #tpu.dot_dimension_numbers<[1], [0], [0], [1], [0, 0, 1, 1], [], []>} : vector<128x128xf32>, vector<128x256xf32>, vector<128x256xf32> -> vector<128x256xf32>
    %c0_4 = arith.constant 0 : index
    %c0_5 = arith.constant 0 : index
    %6 = vector.load %arg6[%c0_4, %c0_5] : memref<128x1xf32, #tpu.memory_space<vmem>>, vector<128x1xf32>
    %cst_6 = arith.constant dense<0xFF800000> : vector<128xf32>
    %7 = vector.multi_reduction <maximumf>, %5, %cst_6 [1] : vector<128x256xf32> to vector<128xf32>
    %8 = vector.shape_cast %7 : vector<128xf32> to vector<128x1xf32>
    %9 = arith.maximumf %6, %8 : vector<128x1xf32>
    %10 = arith.subf %6, %9 : vector<128x1xf32>
    %11 = math.exp %10 : vector<128x1xf32>
    %c0_7 = arith.constant 0 : index
    %c0_8 = arith.constant 0 : index
    %12 = vector.load %arg7[%c0_7, %c0_8] : memref<128x1xf32, #tpu.memory_space<vmem>>, vector<128x1xf32>
    %13 = arith.mulf %11, %12 : vector<128x1xf32>
    %14 = vector.broadcast %9 : vector<128x1xf32> to vector<128x256xf32>
    %15 = arith.subf %5, %14 : vector<128x256xf32>
    %16 = math.exp %15 : vector<128x256xf32>
    %cst_9 = arith.constant dense<0.000000e+00> : vector<128xf32>
    %17 = vector.multi_reduction <add>, %16, %cst_9 [1] : vector<128x256xf32> to vector<128xf32>
    %18 = vector.shape_cast %17 : vector<128xf32> to vector<128x1xf32>
    %19 = arith.addf %13, %18 : vector<128x1xf32>
    %c0_10 = arith.constant 0 : index
    %c0_11 = arith.constant 0 : index
    %20 = vector.load %arg7[%c0_10, %c0_11] : memref<128x1xf32, #tpu.memory_space<vmem>>, vector<128x1xf32>
    tpu.vector_store %arg7[%c0_10, %c0_11], %19 {strides = array<i32>} : memref<128x1xf32, #tpu.memory_space<vmem>>, vector<128x1xf32>,
    %c0_12 = arith.constant 0 : index
    %c0_13 = arith.constant 0 : index
    %21 = vector.load %arg6[%c0_12, %c0_13] : memref<128x1xf32, #tpu.memory_space<vmem>>, vector<128x1xf32>
    tpu.vector_store %arg6[%c0_12, %c0_13], %9 {strides = array<i32>} : memref<128x1xf32, #tpu.memory_space<vmem>>, vector<128x1xf32>,
    %c1_i32 = arith.constant 1 : i32
    %22 = arith.cmpi eq, %arg1, %c1_i32 : i32
    %23 = arith.extui %22 : i1 to i32
    %c0_i32_14 = arith.constant 0 : i32
    %24 = arith.cmpi ne, %23, %c0_i32_14 : i32
    scf.if %24 {
      %c0_15 = arith.constant 0 : index
      %c0_16 = arith.constant 0 : index
      %25 = vector.load %arg3[%c0_15, %c0_16] : memref<128x128xf32, #tpu.memory_space<vmem>>, vector<128x128xf32>
      %26 = arith.mulf %25, %3 : vector<128x128xf32>
      %cst_17 = arith.constant dense<0.000000e+00> : vector<128xf32>
      %27 = vector.multi_reduction <add>, %26, %cst_17 [1] : vector<128x128xf32> to vector<128xf32>
      %28 = vector.shape_cast %27 : vector<128xf32> to vector<128x1xf32>
      %c0_18 = arith.constant 0 : index
      %c0_19 = arith.constant 0 : index
      %29 = vector.load %arg6[%c0_18, %c0_19] : memref<128x1xf32, #tpu.memory_space<vmem>>, vector<128x1xf32>
      %c0_20 = arith.constant 0 : index
      %c0_21 = arith.constant 0 : index
      %30 = vector.load %arg7[%c0_20, %c0_21] : memref<128x1xf32, #tpu.memory_space<vmem>>, vector<128x1xf32>
      %31 = math.log %30 : vector<128x1xf32>
      %32 = arith.addf %29, %31 : vector<128x1xf32>
      %33 = arith.subf %28, %32 : vector<128x1xf32>
      %c0_22 = arith.constant 0 : index
      %c0_23 = arith.constant 0 : index
      %34 = vector.load %arg5[%c0_22, %c0_23] : memref<128x1xf32, #tpu.memory_space<vmem>>, vector<128x1xf32>
      tpu.vector_store %arg5[%c0_22, %c0_23], %33 {strides = array<i32>} : memref<128x1xf32, #tpu.memory_space<vmem>>, vector<128x1xf32>,
    } else {
    }
    return
  }
  func.func @transform_0(%arg0: i32, %arg1: i32) -> (i32, i32) {
    %c0_i32 = arith.constant 0 : i32
    %c0_i32_0 = arith.constant 0 : i32
    return %arg0, %c0_i32 : i32, i32
  }
  func.func @transform_1(%arg0: i32, %arg1: i32) -> (i32, i32) {
    %c0_i32 = arith.constant 0 : i32
    %c0_i32_0 = arith.constant 0 : i32
    return %arg0, %c0_i32 : i32, i32
  }
  func.func @transform_2(%arg0: i32, %arg1: i32) -> (i32, i32) {
    %c0_i32 = arith.constant 0 : i32
    %c0_i32_0 = arith.constant 0 : i32
    return %c0_i32, %arg1 : i32, i32
  }
  func.func @transform_3(%arg0: i32, %arg1: i32) -> (i32, i32) {
    %c0_i32 = arith.constant 0 : i32
    %c0_i32_0 = arith.constant 0 : i32
    return %arg0, %c0_i32 : i32, i32
  }
}

</mosaic_0001>

<llo_original>
// kernel: tpu_custom_call.1
$region0: #{tpu_custom_call.1}
  #allocation0 [shape = 'u32[]', space=smem, size = 0x4, offset = 0x4, fixed_abs, tag = 'smem constant byte address 0x4 - core index']
  #allocation1 [shape = 'u32[144,128]{1,0:T(1,128)}', space=vmem, size = 0x12000, scoped, tag = 'internal scratch']
  #allocation2 [shape = 'f32[128,1]{1,0:T(8,128)}', space=vmem, size = 0x10000, scoped, tag = 'scratch operand']
  #allocation3 [shape = 'f32[128,1]{1,0:T(8,128)}', space=vmem, size = 0x10000, scoped, tag = 'scratch operand']
  %s0 = inlined_call_operand.hbm [shape: f32[128,128], index: 0, kind: input, shape index: {}]
  %s1 = inlined_call_operand.hbm [shape: f32[128,128], index: 1, kind: input, shape index: {}]
  %s2 = inlined_call_operand.hbm [shape: f32[128,512], index: 2, kind: input, shape index: {}]
  %s3 = inlined_call_operand.vmem [shape: f32[128,1], index: 3, kind: output, shape index: {}]
  %s4 = sld [smem:[#allocation0]]
  $region65: #{tpu_custom_call.1} parent=0
    _
  %s6 = ssub.s32 1, %s4
  %s7 = scalar_select 0, %s6, %s4
  $region1: #{tpu_custom_call.1} parent=0
    #allocation4 [shape = 'u8[65536]{0}', space=vmem, size = 0x10000, scoped, tag = 'input window, operand 0, single buffered']
    #allocation5 [shape = 's32[2]{0}', space=sflag, size = 0x8, scoped, tag = 'scoped memory for tpu_custom_call.1']
    #allocation6 [shape = 'u8[65536]{0}', space=vmem, size = 0x10000, scoped, tag = 'input window, operand 1, single buffered']
    #allocation7 [shape = 's32[1]{0}', space=sflag, size = 0x4, scoped, tag = 'scoped memory for tpu_custom_call.1']
    #allocation8 [shape = 'u8[262144]{0}', space=vmem, size = 0x40000, scoped, tag = 'input window, operand 2']
    %8 = vsyncpa [#allocation5], 0
    %9 = vsyncpa [#allocation7], 0
    loop: start=0, step=1, limit=4
    $region2: #{tpu_custom_call.1} parent=1 // loop_pre_header
      _
    $region3: #{tpu_custom_call.1} parent=1 // loop_header
      %s11 = sphi 0, %s15
      %p12 = scmp.ge.s32.totalorder %s11, 4
      %s18 = sphi 0, %s30
      %s19 = sphi 0, %s26
      %s20 = sphi 0, %s18
      %s21 = sphi 0, %s19
      %s22 = sphi 0, %s20
      %s23 = sphi 0, %s21
      %s33 = sphi 0, %s35
      %s36 = sphi 0, %s33
      %s37 = sphi 0, %s36
      %s53 = sphi 0, %s37
      %s59 = sphi 0, %s61
      %s62 = sphi 0, %s59
      %s63 = sphi 0, %s62
      %s79 = sphi 0, %s63
      %s85 = sphi 0, %s87
      %s88 = sphi 0, %s85
      %s89 = sphi 0, %s88
      %s105 = sphi 0, %s89
      %s111 = sphi 0, %s113
      %s114 = sphi 0, %s111
      %s115 = sphi 0, %s114
      %s131 = sphi 0, %s115
    $region4: #{tpu_custom_call.1} parent=1 // loop_header_branch
      %14 = sbr.rel (%p12) target = $region8
    $region5: #{tpu_custom_call.1} parent=1 // loop_body
      %s16 = ssub.s32 %s11, 1
      %s17 = ssub.s32 %s11, 2
      %s24 = sadd.s32 1, %s19
      %p25 = scmp.ge.s32.totalorder %s24, 2
      %s26 = scalar_select %p25, 0, %s24
      %s27 = sadd.s32 1, %s18
      %s28 = scalar_select %p25, %s27, %s18
      %p29 = scmp.ge.s32.totalorder %s28, 1
      %s30 = scalar_select %p29, 0, %s28
      %s31 = ssub.s32 %s18, %s30
      %p32 = scmp.eq.s32.totalorder %s31, 0
      %s34 = sadd.s32 %s33, 1
      %s35 = scalar_select %p32, %s33, %s34
      %p38 = pneg %p32
      %p39 = scmp.eq.s32.totalorder %s11, 1
      %p40 = por %p38, %p39
      %p41 = scmp.ne.s32.totalorder %s33, %s36
      %p42 = scmp.eq.s32.totalorder %s11, 0
      %p43 = por %p41, %p42
      %p44 = scmp.ne.s32.totalorder %s33, %s36
      %p45 = scmp.eq.s32.totalorder %s16, 1
      %p46 = por %p44, %p45
      %p47 = scmp.ne.s32.totalorder %s36, %s37
      %p48 = scmp.eq.s32.totalorder %s16, 0
      %p49 = por %p47, %p48
      %p50 = scmp.ne.s32.totalorder %s36, %s37
      %p51 = scmp.eq.s32.totalorder %s17, 1
      %p52 = por %p50, %p51
      %p54 = scmp.ne.s32.totalorder %s37, %s53
      %p55 = scmp.eq.s32.totalorder %s17, 0
      %p56 = por %p54, %p55
      %s57 = ssub.s32 %s18, %s30
      %p58 = scmp.eq.s32.totalorder %s57, 0
      %s60 = sadd.s32 %s59, 1
      %s61 = scalar_select %p58, %s59, %s60
      %p64 = pneg %p58
      %p65 = scmp.eq.s32.totalorder %s11, 1
      %p66 = por %p64, %p65
      %p67 = scmp.ne.s32.totalorder %s59, %s62
      %p68 = scmp.eq.s32.totalorder %s11, 0
      %p69 = por %p67, %p68
      %p70 = scmp.ne.s32.totalorder %s59, %s62
      %p71 = scmp.eq.s32.totalorder %s16, 1
      %p72 = por %p70, %p71
      %p73 = scmp.ne.s32.totalorder %s62, %s63
      %p74 = scmp.eq.s32.totalorder %s16, 0
      %p75 = por %p73, %p74
      %p76 = scmp.ne.s32.totalorder %s62, %s63
      %p77 = scmp.eq.s32.totalorder %s17, 1
      %p78 = por %p76, %p77
      %p80 = scmp.ne.s32.totalorder %s63, %s79
      %p81 = scmp.eq.s32.totalorder %s17, 0
      %p82 = por %p80, %p81
      %s83 = ssub.s32 %s19, %s26
      %p84 = scmp.eq.s32.totalorder %s83, 0
      %s86 = sadd.s32 %s85, 1
      %s87 = scalar_select %p84, %s85, %s86
      %p90 = pneg %p84
      %p91 = scmp.eq.s32.totalorder %s11, 1
      %p92 = por %p90, %p91
      %p93 = scmp.ne.s32.totalorder %s85, %s88
      %p94 = scmp.eq.s32.totalorder %s11, 0
      %p95 = por %p93, %p94
      %p96 = scmp.ne.s32.totalorder %s85, %s88
      %p97 = scmp.eq.s32.totalorder %s16, 1
      %p98 = por %p96, %p97
      %p99 = scmp.ne.s32.totalorder %s88, %s89
      %p100 = scmp.eq.s32.totalorder %s16, 0
      %p101 = por %p99, %p100
      %p102 = scmp.ne.s32.totalorder %s88, %s89
      %p103 = scmp.eq.s32.totalorder %s17, 1
      %p104 = por %p102, %p103
      %p106 = scmp.ne.s32.totalorder %s89, %s105
      %p107 = scmp.eq.s32.totalorder %s17, 0
      %p108 = por %p106, %p107
      %s109 = ssub.s32 %s18, %s30
      %p110 = scmp.eq.s32.totalorder %s109, 0
      %s112 = sadd.s32 %s111, 1
      %s113 = scalar_select %p110, %s111, %s112
      %p116 = pneg %p110
      %p117 = scmp.eq.s32.totalorder %s11, 1
      %p118 = por %p116, %p117
      %p119 = scmp.ne.s32.totalorder %s111, %s114
      %p120 = scmp.eq.s32.totalorder %s11, 0
      %p121 = por %p119, %p120
      %p122 = scmp.ne.s32.totalorder %s111, %s114
      %p123 = scmp.eq.s32.totalorder %s16, 1
      %p124 = por %p122, %p123
      %p125 = scmp.ne.s32.totalorder %s114, %s115
      %p126 = scmp.eq.s32.totalorder %s16, 0
      %p127 = por %p125, %p126
      %p128 = scmp.ne.s32.totalorder %s114, %s115
      %p129 = scmp.eq.s32.totalorder %s17, 1
      %p130 = por %p128, %p129
      %p132 = scmp.ne.s32.totalorder %s115, %s131
      %p133 = scmp.eq.s32.totalorder %s17, 0
      %p134 = por %p132, %p133
      %p135 = scmp.le.s32.totalorder 1, %s11
      %p136 = scmp.lt.s32.totalorder %s11, 3
      %p137 = pnand %p135, %p136
      %p138 = pneg %p137
      // Predicated region
      $region9: #{tpu_custom_call.1} parent=5 // pred_check
        _
      $region10: #{tpu_custom_call.1} parent=5 // pred_check_branch
        %140 = sbr.rel (%p137) target = $region12
      $region11: #{tpu_custom_call.1} parent=5 // pred_region
        %s141 = ssub.s32 %s11, 1
        // Predicated region
        $region13: #{tpu_custom_call.1} parent=11 // pred_check
          %p142 = pneg %p49
        $region14: #{tpu_custom_call.1} parent=11 // pred_check_branch
          %144 = sbr.rel (%p142) target = $region16
        $region15: #{tpu_custom_call.1} parent=11 // pred_region
          %s145 = smul.u32 16, %s20
          %s147 = ssub.s32 2048, 2048
          %148 = vsyncadd [#allocation5], %s147
          %s149 = smul.addr %s145, 128
          %s150 = scalar_lea.hbm %s0, %s149
          %s151 = sshll.u32 [#allocation4], 4
          %s152 = int_to_ptr.vmem [resolvable:$true] %s151
          %157 = dma.hbm_to_vmem [thread:$0]  %s150, 2048, %s152, [#allocation5], 128, 128, 8
        $region16: #{tpu_custom_call.1} parent=11 // pred_fallthru
          _
        // Predicated region
        $region17: #{tpu_custom_call.1} parent=11 // pred_check
          %p158 = pneg %p75
        $region18: #{tpu_custom_call.1} parent=11 // pred_check_branch
          %160 = sbr.rel (%p158) target = $region20
        $region19: #{tpu_custom_call.1} parent=11 // pred_region
          %s161 = smul.u32 16, %s20
          %s163 = ssub.s32 2048, 2048
          %164 = vsyncadd [#allocation7], %s163
          %s165 = smul.addr %s161, 128
          %s166 = scalar_lea.hbm %s1, %s165
          %s167 = sshll.u32 [#allocation6], 4
          %s168 = int_to_ptr.vmem [resolvable:$true] %s167
          %173 = dma.hbm_to_vmem [thread:$0]  %s166, 2048, %s168, [#allocation7], 128, 128, 8
        $region20: #{tpu_custom_call.1} parent=11 // pred_fallthru
          _
      $region12: #{tpu_custom_call.1} parent=5 // pred_fallthru
        _
      %p174 = scmp.lt.s32.totalorder %s11, 2
      // Predicated region
      $region21: #{tpu_custom_call.1} parent=5 // pred_check
        %p175 = pneg %p174
      $region22: #{tpu_custom_call.1} parent=5 // pred_check_branch
        %177 = sbr.rel (%p175) target = $region24
      $region23: #{tpu_custom_call.1} parent=5 // pred_region
        // Predicated region
        $region25: #{tpu_custom_call.1} parent=23 // pred_check
          %p178 = pneg %p95
        $region26: #{tpu_custom_call.1} parent=23 // pred_check_branch
          %180 = sbr.rel (%p178) target = $region28
        $region27: #{tpu_custom_call.1} parent=23 // pred_region
          %s181 = sand.u32 %s11, 1
          %s182 = scalar_lea.sflag [#allocation5], %s181
          %s183 = sand.u32 %s85, 1
          %s184 = smul.addr %s183, 256
          %s185 = scalar_lea.vmem [#allocation8], %s184
          %s186 = smul.u32 2, %s19
          %s188 = ssub.s32 4096, 4096
          %189 = vsyncadd %s182, %s188
          %s190 = smul.addr %s186, 128
          %s191 = scalar_lea.hbm %s2, %s190
          %s192 = sshll.u32 %s185, 4
          %s193 = int_to_ptr.vmem [resolvable:$true] %s192
          %198 = dma.hbm_to_vmem [thread:$0]  %s191, 4096, %s193, %s182, 512, 256, 16
        $region28: #{tpu_custom_call.1} parent=23 // pred_fallthru
          _
      $region24: #{tpu_custom_call.1} parent=5 // pred_fallthru
        _
      %p199 = scmp.le.s32.totalorder 1, %s11
      %p200 = scmp.lt.s32.totalorder %s11, 3
      %p201 = pnand %p199, %p200
      %p202 = pneg %p201
      // Predicated region
      $region29: #{tpu_custom_call.1} parent=5 // pred_check
        _
      $region30: #{tpu_custom_call.1} parent=5 // pred_check_branch
        %204 = sbr.rel (%p201) target = $region32
      $region31: #{tpu_custom_call.1} parent=5 // pred_region
        %s205 = ssub.s32 %s11, 1
        // Predicated region
        $region33: #{tpu_custom_call.1} parent=31 // pred_check
          %p206 = pneg %p49
        $region34: #{tpu_custom_call.1} parent=31 // pred_check_branch
          %208 = sbr.rel (%p206) target = $region36
        $region35: #{tpu_custom_call.1} parent=31 // pred_region
          %209 = dma.done [#allocation5], 2048
        $region36: #{tpu_custom_call.1} parent=31 // pred_fallthru
          _
        // Predicated region
        $region37: #{tpu_custom_call.1} parent=31 // pred_check
          %p210 = pneg %p75
        $region38: #{tpu_custom_call.1} parent=31 // pred_check_branch
          %212 = sbr.rel (%p210) target = $region40
        $region39: #{tpu_custom_call.1} parent=31 // pred_region
          %213 = dma.done [#allocation7], 2048
        $region40: #{tpu_custom_call.1} parent=31 // pred_fallthru
          _
        %s214 = sand.u32 %s16, 1
        %s215 = scalar_lea.sflag [#allocation5], %s214
        %s216 = sand.u32 %s88, 1
        %s217 = smul.addr %s216, 256
        %s218 = scalar_lea.vmem [#allocation8], %s217
        // Predicated region
        $region41: #{tpu_custom_call.1} parent=31 // pred_check
          %p219 = pneg %p101
        $region42: #{tpu_custom_call.1} parent=31 // pred_check_branch
          %221 = sbr.rel (%p219) target = $region44
        $region43: #{tpu_custom_call.1} parent=31 // pred_region
          %222 = dma.done %s215, 4096
        $region44: #{tpu_custom_call.1} parent=31 // pred_fallthru
          _
        %p223 = pneg %p49
        %p224 = pneg %p46
        %p225 = pneg %p75
        %p226 = pneg %p72
        %s227 = sand.u32 %s16, 1
        %s228 = scalar_lea.sflag [#allocation5], %s227
        %s229 = sand.u32 %s88, 1
        %s230 = smul.addr %s229, 256
        %s231 = scalar_lea.vmem [#allocation8], %s230
        %p232 = pneg %p101
        %p233 = pneg %p98
        %p234 = pneg %p127
        %p235 = pneg %p124
        %s236 = smul.u32 16, %s20
        %p237 = scmp.lt.s32.totalorder %s236, 15
        %s238 = scalar_select %p237, %s236, 15
        %s239 = smul.addr %s238, 8
        %s240 = scalar_lea.vmem %s3, %s239
        %s241 = smul.u32 16, %s20
        %s242 = smul.u32 16, %s20
        %s243 = smul.u32 2, %s21
        %s244 = smul.u32 16, %s20
        %p245 = scmp.lt.s32.totalorder %s244, 15
        %s246 = scalar_select %p245, %s244, 15
        %s247 = smul.addr %s246, 8
        %s248 = scalar_lea.vmem %s3, %s247
        %s249 = smul.u32 16, %s20
        %p250 = scmp.eq.s32.totalorder %s21, 0
        // Predicated region
        $region45: #{tpu_custom_call.1} parent=31 // pred_check
          %p251 = pneg %p250
        $region46: #{tpu_custom_call.1} parent=31 // pred_check_branch
          %253 = sbr.rel (%p251) target = $region48
        $region47: #{tpu_custom_call.1} parent=31 // pred_region
          %vm254 = vcmask 7168
          %255 = vst.msk [vmem:[#allocation2] sm:$0xff] %vm254, -inf
          %256 = vst.msk [vmem:[#allocation2 + $0x8] sm:$0xff] %vm254, -inf
          %257 = vst.msk [vmem:[#allocation2 + $0x10] sm:$0xff] %vm254, -inf
          %258 = vst.msk [vmem:[#allocation2 + $0x18] sm:$0xff] %vm254, -inf
          %259 = vst.msk [vmem:[#allocation2 + $0x20] sm:$0xff] %vm254, -inf
          %260 = vst.msk [vmem:[#allocation2 + $0x28] sm:$0xff] %vm254, -inf
          %261 = vst.msk [vmem:[#allocation2 + $0x30] sm:$0xff] %vm254, -inf
          %262 = vst.msk [vmem:[#allocation2 + $0x38] sm:$0xff] %vm254, -inf
          %263 = vst.msk [vmem:[#allocation2 + $0x40] sm:$0xff] %vm254, -inf
          %264 = vst.msk [vmem:[#allocation2 + $0x48] sm:$0xff] %vm254, -inf
          %265 = vst.msk [vmem:[#allocation2 + $0x50] sm:$0xff] %vm254, -inf
          %266 = vst.msk [vmem:[#allocation2 + $0x58] sm:$0xff] %vm254, -inf
          %267 = vst.msk [vmem:[#allocation2 + $0x60] sm:$0xff] %vm254, -inf
          %268 = vst.msk [vmem:[#allocation2 + $0x68] sm:$0xff] %vm254, -inf
          %269 = vst.msk [vmem:[#allocation2 + $0x70] sm:$0xff] %vm254, -inf
          %270 = vst.msk [vmem:[#allocation2 + $0x78] sm:$0xff] %vm254, -inf
          %271 = vst.msk [vmem:[#allocation3] sm:$0xff] %vm254, 0.0
          %272 = vst.msk [vmem:[#allocation3 + $0x8] sm:$0xff] %vm254, 0.0
          %273 = vst.msk [vmem:[#allocation3 + $0x10] sm:$0xff] %vm254, 0.0
          %274 = vst.msk [vmem:[#allocation3 + $0x18] sm:$0xff] %vm254, 0.0
          %275 = vst.msk [vmem:[#allocation3 + $0x20] sm:$0xff] %vm254, 0.0
          %276 = vst.msk [vmem:[#allocation3 + $0x28] sm:$0xff] %vm254, 0.0
          %277 = vst.msk [vmem:[#allocation3 + $0x30] sm:$0xff] %vm254, 0.0
          %278 = vst.msk [vmem:[#allocation3 + $0x38] sm:$0xff] %vm254, 0.0
          %279 = vst.msk [vmem:[#allocation3 + $0x40] sm:$0xff] %vm254, 0.0
          %280 = vst.msk [vmem:[#allocation3 + $0x48] sm:$0xff] %vm254, 0.0
          %281 = vst.msk [vmem:[#allocation3 + $0x50] sm:$0xff] %vm254, 0.0
          %282 = vst.msk [vmem:[#allocation3 + $0x58] sm:$0xff] %vm254, 0.0
          %283 = vst.msk [vmem:[#allocation3 + $0x60] sm:$0xff] %vm254, 0.0
          %284 = vst.msk [vmem:[#allocation3 + $0x68] sm:$0xff] %vm254, 0.0
          %285 = vst.msk [vmem:[#allocation3 + $0x70] sm:$0xff] %vm254, 0.0
          %286 = vst.msk [vmem:[#allocation3 + $0x78] sm:$0xff] %vm254, 0.0
        $region48: #{tpu_custom_call.1} parent=31 // pred_fallthru
          _
        %v287 = vld [vmem:[#allocation4] sm:$0xff]
        %v288 = vld [vmem:[#allocation4 + $0x8] sm:$0xff]
        %v289 = vld [vmem:[#allocation4 + $0x10] sm:$0xff]
        %v290 = vld [vmem:[#allocation4 + $0x18] sm:$0xff]
        %v291 = vld [vmem:[#allocation4 + $0x20] sm:$0xff]
        %v292 = vld [vmem:[#allocation4 + $0x28] sm:$0xff]
        %v293 = vld [vmem:[#allocation4 + $0x30] sm:$0xff]
        %v294 = vld [vmem:[#allocation4 + $0x38] sm:$0xff]
        %v295 = vld [vmem:[#allocation4 + $0x40] sm:$0xff]
        %v296 = vld [vmem:[#allocation4 + $0x48] sm:$0xff]
        %v297 = vld [vmem:[#allocation4 + $0x50] sm:$0xff]
        %v298 = vld [vmem:[#allocation4 + $0x58] sm:$0xff]
        %v299 = vld [vmem:[#allocation4 + $0x60] sm:$0xff]
        %v300 = vld [vmem:[#allocation4 + $0x68] sm:$0xff]
        %v301 = vld [vmem:[#allocation4 + $0x70] sm:$0xff]
        %v302 = vld [vmem:[#allocation4 + $0x78] sm:$0xff]
        %v303 = vld [vmem:[%s218] sm:$0xff]
        %v304 = vld [vmem:[%s218 + $0x8] sm:$0xff]
        %v305 = vld [vmem:[%s218 + $0x10] sm:$0xff]
        %v306 = vld [vmem:[%s218 + $0x18] sm:$0xff]
        %v307 = vld [vmem:[%s218 + $0x20] sm:$0xff]
        %v308 = vld [vmem:[%s218 + $0x28] sm:$0xff]
        %v309 = vld [vmem:[%s218 + $0x30] sm:$0xff]
        %v310 = vld [vmem:[%s218 + $0x38] sm:$0xff]
        %v311 = vld [vmem:[%s218 + $0x40] sm:$0xff]
        %v312 = vld [vmem:[%s218 + $0x48] sm:$0xff]
        %v313 = vld [vmem:[%s218 + $0x50] sm:$0xff]
        %v314 = vld [vmem:[%s218 + $0x58] sm:$0xff]
        %v315 = vld [vmem:[%s218 + $0x60] sm:$0xff]
        %v316 = vld [vmem:[%s218 + $0x68] sm:$0xff]
        %v317 = vld [vmem:[%s218 + $0x70] sm:$0xff]
        %v318 = vld [vmem:[%s218 + $0x78] sm:$0xff]
        %v319 = vld [vmem:[%s218 + $0x80] sm:$0xff]
        %v320 = vld [vmem:[%s218 + $0x88] sm:$0xff]
        %v321 = vld [vmem:[%s218 + $0x90] sm:$0xff]
        %v322 = vld [vmem:[%s218 + $0x98] sm:$0xff]
        %v323 = vld [vmem:[%s218 + $0xa0] sm:$0xff]
        %v324 = vld [vmem:[%s218 + $0xa8] sm:$0xff]
        %v325 = vld [vmem:[%s218 + $0xb0] sm:$0xff]
        %v326 = vld [vmem:[%s218 + $0xb8] sm:$0xff]
        %v327 = vld [vmem:[%s218 + $0xc0] sm:$0xff]
        %v328 = vld [vmem:[%s218 + $0xc8] sm:$0xff]
        %v329 = vld [vmem:[%s218 + $0xd0] sm:$0xff]
        %v330 = vld [vmem:[%s218 + $0xd8] sm:$0xff]
        %v331 = vld [vmem:[%s218 + $0xe0] sm:$0xff]
        %v332 = vld [vmem:[%s218 + $0xe8] sm:$0xff]
        %v333 = vld [vmem:[%s218 + $0xf0] sm:$0xff]
        %v334 = vld [vmem:[%s218 + $0xf8] sm:$0xff]
        %335 = vmatprep.subr.mxu0 %v334
        %336 = vmatpush1.msra.mxu0 %v333
        %337 = vmatprep.subr.mxu0 %v332
        %338 = vmatpush1.msra.mxu0 %v331
        %339 = vmatprep.subr.mxu0 %v330
        %340 = vmatpush1.msra.mxu0 %v329
        %341 = vmatprep.subr.mxu0 %v328
        %342 = vmatpush1.msra.mxu0 %v327
        %343 = vmatprep.subr.mxu0 %v326
        %344 = vmatpush1.msra.mxu0 %v325
        %345 = vmatprep.subr.mxu0 %v324
        %346 = vmatpush1.msra.mxu0 %v323
        %347 = vmatprep.subr.mxu0 %v322
        %348 = vmatpush1.msra.mxu0 %v321
        %349 = vmatprep.subr.mxu0 %v320
        %350 = vmatpush1.msra.mxu0 %v319
        %351 = vmatprep.subr.mxu0 %v318
        %352 = vmatpush1.msra.mxu0 %v317
        %353 = vmatprep.subr.mxu0 %v316
        %354 = vmatpush1.msra.mxu0 %v315
        %355 = vmatprep.subr.mxu0 %v314
        %356 = vmatpush1.msra.mxu0 %v313
        %357 = vmatprep.subr.mxu0 %v312
        %358 = vmatpush1.msra.mxu0 %v311
        %359 = vmatprep.subr.mxu0 %v310
        %360 = vmatpush1.msra.mxu0 %v309
        %361 = vmatprep.subr.mxu0 %v308
        %362 = vmatpush1.msra.mxu0 %v307
        %363 = vmatprep.subr.mxu0 %v306
        %364 = vmatpush1.msra.mxu0 %v305
        %365 = vmatprep.subr.mxu0 %v304
        %366 = vmatpush1.msra.mxu0 %v303
        %367 = vmatprep.subr.mxu0 0.0
        %368 = vmatpush2.msra.mxu0 0.0
        %369 = vmatprep.subr.mxu0 0.0
        %370 = vmatpush2.msra.mxu0 0.0
        %371 = vmatprep.subr.mxu0 0.0
        %372 = vmatpush2.msra.mxu0 0.0
        %373 = vmatprep.subr.mxu0 0.0
        %374 = vmatpush2.msra.mxu0 0.0
        %375 = vmatprep.subr.mxu0 0.0
        %376 = vmatpush2.msra.mxu0 0.0
        %377 = vmatprep.subr.mxu0 0.0
        %378 = vmatpush2.msra.mxu0 0.0
        %379 = vmatprep.subr.mxu0 0.0
        %380 = vmatpush2.msra.mxu0 0.0
        %381 = vmatprep.subr.mxu0 0.0
        %382 = vmatpush2.msra.mxu0 0.0
        %383 = vmatprep.subr.mxu0 0.0
        %384 = vmatpush2.msra.mxu0 0.0
        %385 = vmatprep.subr.mxu0 0.0
        %386 = vmatpush2.msra.mxu0 0.0
        %387 = vmatprep.subr.mxu0 0.0
        %388 = vmatpush2.msra.mxu0 0.0
        %389 = vmatprep.subr.mxu0 0.0
        %390 = vmatpush2.msra.mxu0 0.0
        %391 = vmatprep.subr.mxu0 0.0
        %392 = vmatpush2.msra.mxu0 0.0
        %393 = vmatprep.subr.mxu0 0.0
        %394 = vmatpush2.msra.mxu0 0.0
        %395 = vmatprep.subr.mxu0 0.0
        %396 = vmatpush2.msra.mxu0 0.0
        %397 = vmatprep.subr.mxu0 0.0
        %398 = vmatpush2.msra.mxu0 0.0
        %399 = vmatprep.mubr.f32.mxu0 0.0
        %400 = vmatmul.mubr.f32.gmra.mxu0 %v287
        %v401 = vpop.f32.mrf.mxu0
        %v402 = vadd.f32 0.0, %v401
        %v403 = vpop.f32.mrf.mxu0
        %v404 = vadd.f32 0.0, %v403
        %405 = vmatprep.mubr.f32.mxu0 0.0
        %406 = vmatmul.mubr.f32.gmra.mxu0 %v288
        %v407 = vpop.f32.mrf.mxu0
        %v408 = vadd.f32 0.0, %v407
        %v409 = vpop.f32.mrf.mxu0
        %v410 = vadd.f32 0.0, %v409
        %411 = vmatprep.mubr.f32.mxu0 0.0
        %412 = vmatmul.mubr.f32.gmra.mxu0 %v289
        %v413 = vpop.f32.mrf.mxu0
        %v414 = vadd.f32 0.0, %v413
        %v415 = vpop.f32.mrf.mxu0
        %v416 = vadd.f32 0.0, %v415
        %417 = vmatprep.mubr.f32.mxu0 0.0
        %418 = vmatmul.mubr.f32.gmra.mxu0 %v290
        %v419 = vpop.f32.mrf.mxu0
        %v420 = vadd.f32 0.0, %v419
        %v421 = vpop.f32.mrf.mxu0
        %v422 = vadd.f32 0.0, %v421
        %423 = vmatprep.mubr.f32.mxu0 0.0
        %424 = vmatmul.mubr.f32.gmra.mxu0 %v291
        %v425 = vpop.f32.mrf.mxu0
        %v426 = vadd.f32 0.0, %v425
        %v427 = vpop.f32.mrf.mxu0
        %v428 = vadd.f32 0.0, %v427
        %429 = vmatprep.mubr.f32.mxu0 0.0
        %430 = vmatmul.mubr.f32.gmra.mxu0 %v292
        %v431 = vpop.f32.mrf.mxu0
        %v432 = vadd.f32 0.0, %v431
        %v433 = vpop.f32.mrf.mxu0
        %v434 = vadd.f32 0.0, %v433
        %435 = vmatprep.mubr.f32.mxu0 0.0
        %436 = vmatmul.mubr.f32.gmra.mxu0 %v293
        %v437 = vpop.f32.mrf.mxu0
        %v438 = vadd.f32 0.0, %v437
        %v439 = vpop.f32.mrf.mxu0
        %v440 = vadd.f32 0.0, %v439
        %441 = vmatprep.mubr.f32.mxu0 0.0
        %442 = vmatmul.mubr.f32.gmra.mxu0 %v294
        %v443 = vpop.f32.mrf.mxu0
        %v444 = vadd.f32 0.0, %v443
        %v445 = vpop.f32.mrf.mxu0
        %v446 = vadd.f32 0.0, %v445
        %447 = vmatprep.mubr.f32.mxu0 0.0
        %448 = vmatmul.mubr.f32.gmra.mxu0 %v295
        %v449 = vpop.f32.mrf.mxu0
        %v450 = vadd.f32 0.0, %v449
        %v451 = vpop.f32.mrf.mxu0
        %v452 = vadd.f32 0.0, %v451
        %453 = vmatprep.mubr.f32.mxu0 0.0
        %454 = vmatmul.mubr.f32.gmra.mxu0 %v296
        %v455 = vpop.f32.mrf.mxu0
        %v456 = vadd.f32 0.0, %v455
        %v457 = vpop.f32.mrf.mxu0
        %v458 = vadd.f32 0.0, %v457
        %459 = vmatprep.mubr.f32.mxu0 0.0
        %460 = vmatmul.mubr.f32.gmra.mxu0 %v297
        %v461 = vpop.f32.mrf.mxu0
        %v462 = vadd.f32 0.0, %v461
        %v463 = vpop.f32.mrf.mxu0
        %v464 = vadd.f32 0.0, %v463
        %465 = vmatprep.mubr.f32.mxu0 0.0
        %466 = vmatmul.mubr.f32.gmra.mxu0 %v298
        %v467 = vpop.f32.mrf.mxu0
        %v468 = vadd.f32 0.0, %v467
        %v469 = vpop.f32.mrf.mxu0
        %v470 = vadd.f32 0.0, %v469
        %471 = vmatprep.mubr.f32.mxu0 0.0
        %472 = vmatmul.mubr.f32.gmra.mxu0 %v299
        %v473 = vpop.f32.mrf.mxu0
        %v474 = vadd.f32 0.0, %v473
        %v475 = vpop.f32.mrf.mxu0
        %v476 = vadd.f32 0.0, %v475
        %477 = vmatprep.mubr.f32.mxu0 0.0
        %478 = vmatmul.mubr.f32.gmra.mxu0 %v300
        %v479 = vpop.f32.mrf.mxu0
        %v480 = vadd.f32 0.0, %v479
        %v481 = vpop.f32.mrf.mxu0
        %v482 = vadd.f32 0.0, %v481
        %483 = vmatprep.mubr.f32.mxu0 0.0
        %484 = vmatmul.mubr.f32.gmra.mxu0 %v301
        %v485 = vpop.f32.mrf.mxu0
        %v486 = vadd.f32 0.0, %v485
        %v487 = vpop.f32.mrf.mxu0
        %v488 = vadd.f32 0.0, %v487
        %489 = vmatprep.mubr.f32.mxu0 0.0
        %490 = vmatmul.mubr.f32.gmra.mxu0 %v302
        %v491 = vpop.f32.mrf.mxu0
        %v492 = vadd.f32 0.0, %v491
        %v493 = vpop.f32.mrf.mxu0
        %v494 = vadd.f32 0.0, %v493
        %495 = vdwg.mxu0
        %v496 = vld [vmem:[#allocation2] sm:$0xff]
        %v497 = vld [vmem:[#allocation2 + $0x8] sm:$0xff]
        %v498 = vld [vmem:[#allocation2 + $0x10] sm:$0xff]
        %v499 = vld [vmem:[#allocation2 + $0x18] sm:$0xff]
        %v500 = vld [vmem:[#allocation2 + $0x20] sm:$0xff]
        %v501 = vld [vmem:[#allocation2 + $0x28] sm:$0xff]
        %v502 = vld [vmem:[#allocation2 + $0x30] sm:$0xff]
        %v503 = vld [vmem:[#allocation2 + $0x38] sm:$0xff]
        %v504 = vld [vmem:[#allocation2 + $0x40] sm:$0xff]
        %v505 = vld [vmem:[#allocation2 + $0x48] sm:$0xff]
        %v506 = vld [vmem:[#allocation2 + $0x50] sm:$0xff]
        %v507 = vld [vmem:[#allocation2 + $0x58] sm:$0xff]
        %v508 = vld [vmem:[#allocation2 + $0x60] sm:$0xff]
        %v509 = vld [vmem:[#allocation2 + $0x68] sm:$0xff]
        %v510 = vld [vmem:[#allocation2 + $0x70] sm:$0xff]
        %v511 = vld [vmem:[#allocation2 + $0x78] sm:$0xff]
        %v512 = vmax.f32 %v402, %v404
        %513 = vmax.xlane.f32.xlu0 %v512
        %v514 = vpop.xlane.xlu0 %513
        %v515 = vmax.f32 %v408, %v410
        %516 = vmax.xlane.f32.xlu0 %v515
        %v517 = vpop.xlane.xlu0 %516
        %v518 = vmax.f32 %v414, %v416
        %519 = vmax.xlane.f32.xlu0 %v518
        %v520 = vpop.xlane.xlu0 %519
        %v521 = vmax.f32 %v420, %v422
        %522 = vmax.xlane.f32.xlu0 %v521
        %v523 = vpop.xlane.xlu0 %522
        %v524 = vmax.f32 %v426, %v428
        %525 = vmax.xlane.f32.xlu0 %v524
        %v526 = vpop.xlane.xlu0 %525
        %v527 = vmax.f32 %v432, %v434
        %528 = vmax.xlane.f32.xlu0 %v527
        %v529 = vpop.xlane.xlu0 %528
        %v530 = vmax.f32 %v438, %v440
        %531 = vmax.xlane.f32.xlu0 %v530
        %v532 = vpop.xlane.xlu0 %531
        %v533 = vmax.f32 %v444, %v446
        %534 = vmax.xlane.f32.xlu0 %v533
        %v535 = vpop.xlane.xlu0 %534
        %v536 = vmax.f32 %v450, %v452
        %537 = vmax.xlane.f32.xlu0 %v536
        %v538 = vpop.xlane.xlu0 %537
        %v539 = vmax.f32 %v456, %v458
        %540 = vmax.xlane.f32.xlu0 %v539
        %v541 = vpop.xlane.xlu0 %540
        %v542 = vmax.f32 %v462, %v464
        %543 = vmax.xlane.f32.xlu0 %v542
        %v544 = vpop.xlane.xlu0 %543
        %v545 = vmax.f32 %v468, %v470
        %546 = vmax.xlane.f32.xlu0 %v545
        %v547 = vpop.xlane.xlu0 %546
        %v548 = vmax.f32 %v474, %v476
        %549 = vmax.xlane.f32.xlu0 %v548
        %v550 = vpop.xlane.xlu0 %549
        %v551 = vmax.f32 %v480, %v482
        %552 = vmax.xlane.f32.xlu0 %v551
        %v553 = vpop.xlane.xlu0 %552
        %v554 = vmax.f32 %v486, %v488
        %555 = vmax.xlane.f32.xlu0 %v554
        %v556 = vpop.xlane.xlu0 %555
        %v557 = vmax.f32 %v492, %v494
        %558 = vmax.xlane.f32.xlu0 %v557
        %v559 = vpop.xlane.xlu0 %558
        %v560 = vmax.f32 %v496, %v514
        %v561 = vmax.f32 %v497, %v517
        %v562 = vmax.f32 %v498, %v520
        %v563 = vmax.f32 %v499, %v523
        %v564 = vmax.f32 %v500, %v526
        %v565 = vmax.f32 %v501, %v529
        %v566 = vmax.f32 %v502, %v532
        %v567 = vmax.f32 %v503, %v535
        %v568 = vmax.f32 %v504, %v538
        %v569 = vmax.f32 %v505, %v541
        %v570 = vmax.f32 %v506, %v544
        %v571 = vmax.f32 %v507, %v547
        %v572 = vmax.f32 %v508, %v550
        %v573 = vmax.f32 %v509, %v553
        %v574 = vmax.f32 %v510, %v556
        %v575 = vmax.f32 %v511, %v559
        %v576 = vsub.f32 %v496, %v560
        %v577 = vsub.f32 %v497, %v561
        %v578 = vsub.f32 %v498, %v562
        %v579 = vsub.f32 %v499, %v563
        %v580 = vsub.f32 %v500, %v564
        %v581 = vsub.f32 %v501, %v565
        %v582 = vsub.f32 %v502, %v566
        %v583 = vsub.f32 %v503, %v567
        %v584 = vsub.f32 %v504, %v568
        %v585 = vsub.f32 %v505, %v569
        %v586 = vsub.f32 %v506, %v570
        %v587 = vsub.f32 %v507, %v571
        %v588 = vsub.f32 %v508, %v572
        %v589 = vsub.f32 %v509, %v573
        %v590 = vsub.f32 %v510, %v574
        %v591 = vsub.f32 %v511, %v575
        %v592 = vmul.f32 %v576, 1.442695
        %v593 = vpow.pop %v592
        %v594 = vmul.f32 %v577, 1.442695
        %v595 = vpow.pop %v594
        %v596 = vmul.f32 %v578, 1.442695
        %v597 = vpow.pop %v596
        %v598 = vmul.f32 %v579, 1.442695
        %v599 = vpow.pop %v598
        %v600 = vmul.f32 %v580, 1.442695
        %v601 = vpow.pop %v600
        %v602 = vmul.f32 %v581, 1.442695
        %v603 = vpow.pop %v602
        %v604 = vmul.f32 %v582, 1.442695
        %v605 = vpow.pop %v604
        %v606 = vmul.f32 %v583, 1.442695
        %v607 = vpow.pop %v606
        %v608 = vmul.f32 %v584, 1.442695
        %v609 = vpow.pop %v608
        %v610 = vmul.f32 %v585, 1.442695
        %v611 = vpow.pop %v610
        %v612 = vmul.f32 %v586, 1.442695
        %v613 = vpow.pop %v612
        %v614 = vmul.f32 %v587, 1.442695
        %v615 = vpow.pop %v614
        %v616 = vmul.f32 %v588, 1.442695
        %v617 = vpow.pop %v616
        %v618 = vmul.f32 %v589, 1.442695
        %v619 = vpow.pop %v618
        %v620 = vmul.f32 %v590, 1.442695
        %v621 = vpow.pop %v620
        %v622 = vmul.f32 %v591, 1.442695
        %v623 = vpow.pop %v622
        %v624 = vld [vmem:[#allocation3] sm:$0xff]
        %v625 = vld [vmem:[#allocation3 + $0x8] sm:$0xff]
        %v626 = vld [vmem:[#allocation3 + $0x10] sm:$0xff]
        %v627 = vld [vmem:[#allocation3 + $0x18] sm:$0xff]
        %v628 = vld [vmem:[#allocation3 + $0x20] sm:$0xff]
        %v629 = vld [vmem:[#allocation3 + $0x28] sm:$0xff]
        %v630 = vld [vmem:[#allocation3 + $0x30] sm:$0xff]
        %v631 = vld [vmem:[#allocation3 + $0x38] sm:$0xff]
        %v632 = vld [vmem:[#allocation3 + $0x40] sm:$0xff]
        %v633 = vld [vmem:[#allocation3 + $0x48] sm:$0xff]
        %v634 = vld [vmem:[#allocation3 + $0x50] sm:$0xff]
        %v635 = vld [vmem:[#allocation3 + $0x58] sm:$0xff]
        %v636 = vld [vmem:[#allocation3 + $0x60] sm:$0xff]
        %v637 = vld [vmem:[#allocation3 + $0x68] sm:$0xff]
        %v638 = vld [vmem:[#allocation3 + $0x70] sm:$0xff]
        %v639 = vld [vmem:[#allocation3 + $0x78] sm:$0xff]
        %v640 = vmul.f32 %v593, %v624
        %v641 = vmul.f32 %v595, %v625
        %v642 = vmul.f32 %v597, %v626
        %v643 = vmul.f32 %v599, %v627
        %v644 = vmul.f32 %v601, %v628
        %v645 = vmul.f32 %v603, %v629
        %v646 = vmul.f32 %v605, %v630
        %v647 = vmul.f32 %v607, %v631
        %v648 = vmul.f32 %v609, %v632
        %v649 = vmul.f32 %v611, %v633
        %v650 = vmul.f32 %v613, %v634
        %v651 = vmul.f32 %v615, %v635
        %v652 = vmul.f32 %v617, %v636
        %v653 = vmul.f32 %v619, %v637
        %v654 = vmul.f32 %v621, %v638
        %v655 = vmul.f32 %v623, %v639
        %657 = vset.pattern.permute.xlu0 0
        %658 = vperm.xlu0 %657, %v560
        %v659 = vpop.permute.xlu0 %658
        %662 = vset.pattern.permute.xlu0 0
        %663 = vperm.xlu0 %662, %v561
        %v664 = vpop.permute.xlu0 %663
        %667 = vset.pattern.permute.xlu0 0
        %668 = vperm.xlu0 %667, %v562
        %v669 = vpop.permute.xlu0 %668
        %672 = vset.pattern.permute.xlu0 0
        %673 = vperm.xlu0 %672, %v563
        %v674 = vpop.permute.xlu0 %673
        %677 = vset.pattern.permute.xlu0 0
        %678 = vperm.xlu0 %677, %v564
        %v679 = vpop.permute.xlu0 %678
        %682 = vset.pattern.permute.xlu0 0
        %683 = vperm.xlu0 %682, %v565
        %v684 = vpop.permute.xlu0 %683
        %687 = vset.pattern.permute.xlu0 0
        %688 = vperm.xlu0 %687, %v566
        %v689 = vpop.permute.xlu0 %688
        %692 = vset.pattern.permute.xlu0 0
        %693 = vperm.xlu0 %692, %v567
        %v694 = vpop.permute.xlu0 %693
        %697 = vset.pattern.permute.xlu0 0
        %698 = vperm.xlu0 %697, %v568
        %v699 = vpop.permute.xlu0 %698
        %702 = vset.pattern.permute.xlu0 0
        %703 = vperm.xlu0 %702, %v569
        %v704 = vpop.permute.xlu0 %703
        %707 = vset.pattern.permute.xlu0 0
        %708 = vperm.xlu0 %707, %v570
        %v709 = vpop.permute.xlu0 %708
        %712 = vset.pattern.permute.xlu0 0
        %713 = vperm.xlu0 %712, %v571
        %v714 = vpop.permute.xlu0 %713
        %717 = vset.pattern.permute.xlu0 0
        %718 = vperm.xlu0 %717, %v572
        %v719 = vpop.permute.xlu0 %718
        %722 = vset.pattern.permute.xlu0 0
        %723 = vperm.xlu0 %722, %v573
        %v724 = vpop.permute.xlu0 %723
        %727 = vset.pattern.permute.xlu0 0
        %728 = vperm.xlu0 %727, %v574
        %v729 = vpop.permute.xlu0 %728
        %732 = vset.pattern.permute.xlu0 0
        %733 = vperm.xlu0 %732, %v575
        %v734 = vpop.permute.xlu0 %733
        %v736 = vsub.f32 %v402, %v659
        %v737 = vsub.f32 %v404, %v659
        %v738 = vsub.f32 %v408, %v664
        %v739 = vsub.f32 %v410, %v664
        %v740 = vsub.f32 %v414, %v669
        %v741 = vsub.f32 %v416, %v669
        %v742 = vsub.f32 %v420, %v674
        %v743 = vsub.f32 %v422, %v674
        %v744 = vsub.f32 %v426, %v679
        %v745 = vsub.f32 %v428, %v679
        %v746 = vsub.f32 %v432, %v684
        %v747 = vsub.f32 %v434, %v684
        %v748 = vsub.f32 %v438, %v689
        %v749 = vsub.f32 %v440, %v689
        %v750 = vsub.f32 %v444, %v694
        %v751 = vsub.f32 %v446, %v694
        %v752 = vsub.f32 %v450, %v699
        %v753 = vsub.f32 %v452, %v699
        %v754 = vsub.f32 %v456, %v704
        %v755 = vsub.f32 %v458, %v704
        %v756 = vsub.f32 %v462, %v709
        %v757 = vsub.f32 %v464, %v709
        %v758 = vsub.f32 %v468, %v714
        %v759 = vsub.f32 %v470, %v714
        %v760 = vsub.f32 %v474, %v719
        %v761 = vsub.f32 %v476, %v719
        %v762 = vsub.f32 %v480, %v724
        %v763 = vsub.f32 %v482, %v724
        %v764 = vsub.f32 %v486, %v729
        %v765 = vsub.f32 %v488, %v729
        %v766 = vsub.f32 %v492, %v734
        %v767 = vsub.f32 %v494, %v734
        %v768 = vmul.f32 %v736, 1.442695
        %v769 = vpow.pop %v768
        %v770 = vmul.f32 %v737, 1.442695
        %v771 = vpow.pop %v770
        %v772 = vmul.f32 %v738, 1.442695
        %v773 = vpow.pop %v772
        %v774 = vmul.f32 %v739, 1.442695
        %v775 = vpow.pop %v774
        %v776 = vmul.f32 %v740, 1.442695
        %v777 = vpow.pop %v776
        %v778 = vmul.f32 %v741, 1.442695
        %v779 = vpow.pop %v778
        %v780 = vmul.f32 %v742, 1.442695
        %v781 = vpow.pop %v780
        %v782 = vmul.f32 %v743, 1.442695
        %v783 = vpow.pop %v782
        %v784 = vmul.f32 %v744, 1.442695
        %v785 = vpow.pop %v784
        %v786 = vmul.f32 %v745, 1.442695
        %v787 = vpow.pop %v786
        %v788 = vmul.f32 %v746, 1.442695
        %v789 = vpow.pop %v788
        %v790 = vmul.f32 %v747, 1.442695
        %v791 = vpow.pop %v790
        %v792 = vmul.f32 %v748, 1.442695
        %v793 = vpow.pop %v792
        %v794 = vmul.f32 %v749, 1.442695
        %v795 = vpow.pop %v794
        %v796 = vmul.f32 %v750, 1.442695
        %v797 = vpow.pop %v796
        %v798 = vmul.f32 %v751, 1.442695
        %v799 = vpow.pop %v798
        %v800 = vmul.f32 %v752, 1.442695
        %v801 = vpow.pop %v800
        %v802 = vmul.f32 %v753, 1.442695
        %v803 = vpow.pop %v802
        %v804 = vmul.f32 %v754, 1.442695
        %v805 = vpow.pop %v804
        %v806 = vmul.f32 %v755, 1.442695
        %v807 = vpow.pop %v806
        %v808 = vmul.f32 %v756, 1.442695
        %v809 = vpow.pop %v808
        %v810 = vmul.f32 %v757, 1.442695
        %v811 = vpow.pop %v810
        %v812 = vmul.f32 %v758, 1.442695
        %v813 = vpow.pop %v812
        %v814 = vmul.f32 %v759, 1.442695
        %v815 = vpow.pop %v814
        %v816 = vmul.f32 %v760, 1.442695
        %v817 = vpow.pop %v816
        %v818 = vmul.f32 %v761, 1.442695
        %v819 = vpow.pop %v818
        %v820 = vmul.f32 %v762, 1.442695
        %v821 = vpow.pop %v820
        %v822 = vmul.f32 %v763, 1.442695
        %v823 = vpow.pop %v822
        %v824 = vmul.f32 %v764, 1.442695
        %v825 = vpow.pop %v824
        %v826 = vmul.f32 %v765, 1.442695
        %v827 = vpow.pop %v826
        %v828 = vmul.f32 %v766, 1.442695
        %v829 = vpow.pop %v828
        %v830 = vmul.f32 %v767, 1.442695
        %v831 = vpow.pop %v830
        %v832 = vadd.f32 %v769, %v771
        %833 = vadd.xlane.f32.xlu0 %v832
        %v834 = vpop.xlane.xlu0 %833
        %v835 = vadd.f32 %v773, %v775
        %836 = vadd.xlane.f32.xlu0 %v835
        %v837 = vpop.xlane.xlu0 %836
        %v838 = vadd.f32 %v777, %v779
        %839 = vadd.xlane.f32.xlu0 %v838
        %v840 = vpop.xlane.xlu0 %839
        %v841 = vadd.f32 %v781, %v783
        %842 = vadd.xlane.f32.xlu0 %v841
        %v843 = vpop.xlane.xlu0 %842
        %v844 = vadd.f32 %v785, %v787
        %845 = vadd.xlane.f32.xlu0 %v844
        %v846 = vpop.xlane.xlu0 %845
        %v847 = vadd.f32 %v789, %v791
        %848 = vadd.xlane.f32.xlu0 %v847
        %v849 = vpop.xlane.xlu0 %848
        %v850 = vadd.f32 %v793, %v795
        %851 = vadd.xlane.f32.xlu0 %v850
        %v852 = vpop.xlane.xlu0 %851
        %v853 = vadd.f32 %v797, %v799
        %854 = vadd.xlane.f32.xlu0 %v853
        %v855 = vpop.xlane.xlu0 %854
        %v856 = vadd.f32 %v801, %v803
        %857 = vadd.xlane.f32.xlu0 %v856
        %v858 = vpop.xlane.xlu0 %857
        %v859 = vadd.f32 %v805, %v807
        %860 = vadd.xlane.f32.xlu0 %v859
        %v861 = vpop.xlane.xlu0 %860
        %v862 = vadd.f32 %v809, %v811
        %863 = vadd.xlane.f32.xlu0 %v862
        %v864 = vpop.xlane.xlu0 %863
        %v865 = vadd.f32 %v813, %v815
        %866 = vadd.xlane.f32.xlu0 %v865
        %v867 = vpop.xlane.xlu0 %866
        %v868 = vadd.f32 %v817, %v819
        %869 = vadd.xlane.f32.xlu0 %v868
        %v870 = vpop.xlane.xlu0 %869
        %v871 = vadd.f32 %v821, %v823
        %872 = vadd.xlane.f32.xlu0 %v871
        %v873 = vpop.xlane.xlu0 %872
        %v874 = vadd.f32 %v825, %v827
        %875 = vadd.xlane.f32.xlu0 %v874
        %v876 = vpop.xlane.xlu0 %875
        %v877 = vadd.f32 %v829, %v831
        %878 = vadd.xlane.f32.xlu0 %v877
        %v879 = vpop.xlane.xlu0 %878
        %v880 = vadd.f32 %v640, %v834
        %v881 = vadd.f32 %v641, %v837
        %v882 = vadd.f32 %v642, %v840
        %v883 = vadd.f32 %v643, %v843
        %v884 = vadd.f32 %v644, %v846
        %v885 = vadd.f32 %v645, %v849
        %v886 = vadd.f32 %v646, %v852
        %v887 = vadd.f32 %v647, %v855
        %v888 = vadd.f32 %v648, %v858
        %v889 = vadd.f32 %v649, %v861
        %v890 = vadd.f32 %v650, %v864
        %v891 = vadd.f32 %v651, %v867
        %v892 = vadd.f32 %v652, %v870
        %v893 = vadd.f32 %v653, %v873
        %v894 = vadd.f32 %v654, %v876
        %v895 = vadd.f32 %v655, %v879
        %vm896 = vcmask 7168
        %897 = vst.msk [vmem:[#allocation3] sm:$0xff] %vm896, %v880
        %898 = vst.msk [vmem:[#allocation3 + $0x8] sm:$0xff] %vm896, %v881
        %899 = vst.msk [vmem:[#allocation3 + $0x10] sm:$0xff] %vm896, %v882
        %900 = vst.msk [vmem:[#allocation3 + $0x18] sm:$0xff] %vm896, %v883
        %901 = vst.msk [vmem:[#allocation3 + $0x20] sm:$0xff] %vm896, %v884
        %902 = vst.msk [vmem:[#allocation3 + $0x28] sm:$0xff] %vm896, %v885
        %903 = vst.msk [vmem:[#allocation3 + $0x30] sm:$0xff] %vm896, %v886
        %904 = vst.msk [vmem:[#allocation3 + $0x38] sm:$0xff] %vm896, %v887
        %905 = vst.msk [vmem:[#allocation3 + $0x40] sm:$0xff] %vm896, %v888
        %906 = vst.msk [vmem:[#allocation3 + $0x48] sm:$0xff] %vm896, %v889
        %907 = vst.msk [vmem:[#allocation3 + $0x50] sm:$0xff] %vm896, %v890
        %908 = vst.msk [vmem:[#allocation3 + $0x58] sm:$0xff] %vm896, %v891
        %909 = vst.msk [vmem:[#allocation3 + $0x60] sm:$0xff] %vm896, %v892
        %910 = vst.msk [vmem:[#allocation3 + $0x68] sm:$0xff] %vm896, %v893
        %911 = vst.msk [vmem:[#allocation3 + $0x70] sm:$0xff] %vm896, %v894
        %912 = vst.msk [vmem:[#allocation3 + $0x78] sm:$0xff] %vm896, %v895
        %913 = vst.msk [vmem:[#allocation2] sm:$0xff] %vm896, %v560
        %914 = vst.msk [vmem:[#allocation2 + $0x8] sm:$0xff] %vm896, %v561
        %915 = vst.msk [vmem:[#allocation2 + $0x10] sm:$0xff] %vm896, %v562
        %916 = vst.msk [vmem:[#allocation2 + $0x18] sm:$0xff] %vm896, %v563
        %917 = vst.msk [vmem:[#allocation2 + $0x20] sm:$0xff] %vm896, %v564
        %918 = vst.msk [vmem:[#allocation2 + $0x28] sm:$0xff] %vm896, %v565
        %919 = vst.msk [vmem:[#allocation2 + $0x30] sm:$0xff] %vm896, %v566
        %920 = vst.msk [vmem:[#allocation2 + $0x38] sm:$0xff] %vm896, %v567
        %921 = vst.msk [vmem:[#allocation2 + $0x40] sm:$0xff] %vm896, %v568
        %922 = vst.msk [vmem:[#allocation2 + $0x48] sm:$0xff] %vm896, %v569
        %923 = vst.msk [vmem:[#allocation2 + $0x50] sm:$0xff] %vm896, %v570
        %924 = vst.msk [vmem:[#allocation2 + $0x58] sm:$0xff] %vm896, %v571
        %925 = vst.msk [vmem:[#allocation2 + $0x60] sm:$0xff] %vm896, %v572
        %926 = vst.msk [vmem:[#allocation2 + $0x68] sm:$0xff] %vm896, %v573
        %927 = vst.msk [vmem:[#allocation2 + $0x70] sm:$0xff] %vm896, %v574
        %928 = vst.msk [vmem:[#allocation2 + $0x78] sm:$0xff] %vm896, %v575
        %p929 = scmp.eq.s32.totalorder %s21, 1
        // Predicated region
        $region49: #{tpu_custom_call.1} parent=31 // pred_check
          %p930 = pneg %p929
        $region50: #{tpu_custom_call.1} parent=31 // pred_check_branch
          %932 = sbr.rel (%p930) target = $region52
        $region51: #{tpu_custom_call.1} parent=31 // pred_region
          %v933 = vld [vmem:[#allocation6] sm:$0xff]
          %v934 = vld [vmem:[#allocation6 + $0x8] sm:$0xff]
          %v935 = vld [vmem:[#allocation6 + $0x10] sm:$0xff]
          %v936 = vld [vmem:[#allocation6 + $0x18] sm:$0xff]
          %v937 = vld [vmem:[#allocation6 + $0x20] sm:$0xff]
          %v938 = vld [vmem:[#allocation6 + $0x28] sm:$0xff]
          %v939 = vld [vmem:[#allocation6 + $0x30] sm:$0xff]
          %v940 = vld [vmem:[#allocation6 + $0x38] sm:$0xff]
          %v941 = vld [vmem:[#allocation6 + $0x40] sm:$0xff]
          %v942 = vld [vmem:[#allocation6 + $0x48] sm:$0xff]
          %v943 = vld [vmem:[#allocation6 + $0x50] sm:$0xff]
          %v944 = vld [vmem:[#allocation6 + $0x58] sm:$0xff]
          %v945 = vld [vmem:[#allocation6 + $0x60] sm:$0xff]
          %v946 = vld [vmem:[#allocation6 + $0x68] sm:$0xff]
          %v947 = vld [vmem:[#allocation6 + $0x70] sm:$0xff]
          %v948 = vld [vmem:[#allocation6 + $0x78] sm:$0xff]
          %v949 = vmul.f32 %v933, %v287
          %v950 = vmul.f32 %v934, %v288
          %v951 = vmul.f32 %v935, %v289
          %v952 = vmul.f32 %v936, %v290
          %v953 = vmul.f32 %v937, %v291
          %v954 = vmul.f32 %v938, %v292
          %v955 = vmul.f32 %v939, %v293
          %v956 = vmul.f32 %v940, %v294
          %v957 = vmul.f32 %v941, %v295
          %v958 = vmul.f32 %v942, %v296
          %v959 = vmul.f32 %v943, %v297
          %v960 = vmul.f32 %v944, %v298
          %v961 = vmul.f32 %v945, %v299
          %v962 = vmul.f32 %v946, %v300
          %v963 = vmul.f32 %v947, %v301
          %v964 = vmul.f32 %v948, %v302
          %965 = vadd.xlane.f32.xlu0 %v949
          %v966 = vpop.xlane.xlu0 %965
          %967 = vadd.xlane.f32.xlu0 %v950
          %v968 = vpop.xlane.xlu0 %967
          %969 = vadd.xlane.f32.xlu0 %v951
          %v970 = vpop.xlane.xlu0 %969
          %971 = vadd.xlane.f32.xlu0 %v952
          %v972 = vpop.xlane.xlu0 %971
          %973 = vadd.xlane.f32.xlu0 %v953
          %v974 = vpop.xlane.xlu0 %973
          %975 = vadd.xlane.f32.xlu0 %v954
          %v976 = vpop.xlane.xlu0 %975
          %977 = vadd.xlane.f32.xlu0 %v955
          %v978 = vpop.xlane.xlu0 %977
          %979 = vadd.xlane.f32.xlu0 %v956
          %v980 = vpop.xlane.xlu0 %979
          %981 = vadd.xlane.f32.xlu0 %v957
          %v982 = vpop.xlane.xlu0 %981
          %983 = vadd.xlane.f32.xlu0 %v958
          %v984 = vpop.xlane.xlu0 %983
          %985 = vadd.xlane.f32.xlu0 %v959
          %v986 = vpop.xlane.xlu0 %985
          %987 = vadd.xlane.f32.xlu0 %v960
          %v988 = vpop.xlane.xlu0 %987
          %989 = vadd.xlane.f32.xlu0 %v961
          %v990 = vpop.xlane.xlu0 %989
          %991 = vadd.xlane.f32.xlu0 %v962
          %v992 = vpop.xlane.xlu0 %991
          %993 = vadd.xlane.f32.xlu0 %v963
          %v994 = vpop.xlane.xlu0 %993
          %995 = vadd.xlane.f32.xlu0 %v964
          %v996 = vpop.xlane.xlu0 %995
          %v997 = vld [vmem:[#allocation2] sm:$0xff]
          %v998 = vld [vmem:[#allocation2 + $0x8] sm:$0xff]
          %v999 = vld [vmem:[#allocation2 + $0x10] sm:$0xff]
          %v1000 = vld [vmem:[#allocation2 + $0x18] sm:$0xff]
          %v1001 = vld [vmem:[#allocation2 + $0x20] sm:$0xff]
          %v1002 = vld [vmem:[#allocation2 + $0x28] sm:$0xff]
          %v1003 = vld [vmem:[#allocation2 + $0x30] sm:$0xff]
          %v1004 = vld [vmem:[#allocation2 + $0x38] sm:$0xff]
          %v1005 = vld [vmem:[#allocation2 + $0x40] sm:$0xff]
          %v1006 = vld [vmem:[#allocation2 + $0x48] sm:$0xff]
          %v1007 = vld [vmem:[#allocation2 + $0x50] sm:$0xff]
          %v1008 = vld [vmem:[#allocation2 + $0x58] sm:$0xff]
          %v1009 = vld [vmem:[#allocation2 + $0x60] sm:$0xff]
          %v1010 = vld [vmem:[#allocation2 + $0x68] sm:$0xff]
          %v1011 = vld [vmem:[#allocation2 + $0x70] sm:$0xff]
          %v1012 = vld [vmem:[#allocation2 + $0x78] sm:$0xff]
          %v1013 = vld [vmem:[#allocation3] sm:$0xff]
          %v1014 = vld [vmem:[#allocation3 + $0x8] sm:$0xff]
          %v1015 = vld [vmem:[#allocation3 + $0x10] sm:$0xff]
          %v1016 = vld [vmem:[#allocation3 + $0x18] sm:$0xff]
          %v1017 = vld [vmem:[#allocation3 + $0x20] sm:$0xff]
          %v1018 = vld [vmem:[#allocation3 + $0x28] sm:$0xff]
          %v1019 = vld [vmem:[#allocation3 + $0x30] sm:$0xff]
          %v1020 = vld [vmem:[#allocation3 + $0x38] sm:$0xff]
          %v1021 = vld [vmem:[#allocation3 + $0x40] sm:$0xff]
          %v1022 = vld [vmem:[#allocation3 + $0x48] sm:$0xff]
          %v1023 = vld [vmem:[#allocation3 + $0x50] sm:$0xff]
          %v1024 = vld [vmem:[#allocation3 + $0x58] sm:$0xff]
          %v1025 = vld [vmem:[#allocation3 + $0x60] sm:$0xff]
          %v1026 = vld [vmem:[#allocation3 + $0x68] sm:$0xff]
          %v1027 = vld [vmem:[#allocation3 + $0x70] sm:$0xff]
          %v1028 = vld [vmem:[#allocation3 + $0x78] sm:$0xff]
          %v1029 = vlog2.pop %v1013
          %v1030 = vmul.f32 %v1029, 0.6931472
          %v1031 = vlog2.pop %v1014
          %v1032 = vmul.f32 %v1031, 0.6931472
          %v1033 = vlog2.pop %v1015
          %v1034 = vmul.f32 %v1033, 0.6931472
          %v1035 = vlog2.pop %v1016
          %v1036 = vmul.f32 %v1035, 0.6931472
          %v1037 = vlog2.pop %v1017
          %v1038 = vmul.f32 %v1037, 0.6931472
          %v1039 = vlog2.pop %v1018
          %v1040 = vmul.f32 %v1039, 0.6931472
          %v1041 = vlog2.pop %v1019
          %v1042 = vmul.f32 %v1041, 0.6931472
          %v1043 = vlog2.pop %v1020
          %v1044 = vmul.f32 %v1043, 0.6931472
          %v1045 = vlog2.pop %v1021
          %v1046 = vmul.f32 %v1045, 0.6931472
          %v1047 = vlog2.pop %v1022
          %v1048 = vmul.f32 %v1047, 0.6931472
          %v1049 = vlog2.pop %v1023
          %v1050 = vmul.f32 %v1049, 0.6931472
          %v1051 = vlog2.pop %v1024
          %v1052 = vmul.f32 %v1051, 0.6931472
          %v1053 = vlog2.pop %v1025
          %v1054 = vmul.f32 %v1053, 0.6931472
          %v1055 = vlog2.pop %v1026
          %v1056 = vmul.f32 %v1055, 0.6931472
          %v1057 = vlog2.pop %v1027
          %v1058 = vmul.f32 %v1057, 0.6931472
          %v1059 = vlog2.pop %v1028
          %v1060 = vmul.f32 %v1059, 0.6931472
          %v1061 = vadd.f32 %v997, %v1030
          %v1062 = vadd.f32 %v998, %v1032
          %v1063 = vadd.f32 %v999, %v1034
          %v1064 = vadd.f32 %v1000, %v1036
          %v1065 = vadd.f32 %v1001, %v1038
          %v1066 = vadd.f32 %v1002, %v1040
          %v1067 = vadd.f32 %v1003, %v1042
          %v1068 = vadd.f32 %v1004, %v1044
          %v1069 = vadd.f32 %v1005, %v1046
          %v1070 = vadd.f32 %v1006, %v1048
          %v1071 = vadd.f32 %v1007, %v1050
          %v1072 = vadd.f32 %v1008, %v1052
          %v1073 = vadd.f32 %v1009, %v1054
          %v1074 = vadd.f32 %v1010, %v1056
          %v1075 = vadd.f32 %v1011, %v1058
          %v1076 = vadd.f32 %v1012, %v1060
          %v1077 = vsub.f32 %v966, %v1061
          %v1078 = vsub.f32 %v968, %v1062
          %v1079 = vsub.f32 %v970, %v1063
          %v1080 = vsub.f32 %v972, %v1064
          %v1081 = vsub.f32 %v974, %v1065
          %v1082 = vsub.f32 %v976, %v1066
          %v1083 = vsub.f32 %v978, %v1067
          %v1084 = vsub.f32 %v980, %v1068
          %v1085 = vsub.f32 %v982, %v1069
          %v1086 = vsub.f32 %v984, %v1070
          %v1087 = vsub.f32 %v986, %v1071
          %v1088 = vsub.f32 %v988, %v1072
          %v1089 = vsub.f32 %v990, %v1073
          %v1090 = vsub.f32 %v992, %v1074
          %v1091 = vsub.f32 %v994, %v1075
          %v1092 = vsub.f32 %v996, %v1076
          %1093 = vst.msk [vmem:[%s248] sm:$0xff] %vm896, %v1077
          %1094 = vst.msk [vmem:[%s248 + $0x8] sm:$0xff] %vm896, %v1078
          %1095 = vst.msk [vmem:[%s248 + $0x10] sm:$0xff] %vm896, %v1079
          %1096 = vst.msk [vmem:[%s248 + $0x18] sm:$0xff] %vm896, %v1080
          %1097 = vst.msk [vmem:[%s248 + $0x20] sm:$0xff] %vm896, %v1081
          %1098 = vst.msk [vmem:[%s248 + $0x28] sm:$0xff] %vm896, %v1082
          %1099 = vst.msk [vmem:[%s248 + $0x30] sm:$0xff] %vm896, %v1083
          %1100 = vst.msk [vmem:[%s248 + $0x38] sm:$0xff] %vm896, %v1084
          %1101 = vst.msk [vmem:[%s248 + $0x40] sm:$0xff] %vm896, %v1085
          %1102 = vst.msk [vmem:[%s248 + $0x48] sm:$0xff] %vm896, %v1086
          %1103 = vst.msk [vmem:[%s248 + $0x50] sm:$0xff] %vm896, %v1087
          %1104 = vst.msk [vmem:[%s248 + $0x58] sm:$0xff] %vm896, %v1088
          %1105 = vst.msk [vmem:[%s248 + $0x60] sm:$0xff] %vm896, %v1089
          %1106 = vst.msk [vmem:[%s248 + $0x68] sm:$0xff] %vm896, %v1090
          %1107 = vst.msk [vmem:[%s248 + $0x70] sm:$0xff] %vm896, %v1091
          %1108 = vst.msk [vmem:[%s248 + $0x78] sm:$0xff] %vm896, %v1092
        $region52: #{tpu_custom_call.1} parent=31 // pred_fallthru
          _
        %s1109 = smul.u32 16, %s20
        %p1110 = scmp.lt.s32.totalorder %s1109, 15
        %s1111 = scalar_select %p1110, %s1109, 15
        %s1112 = smul.addr %s1111, 8
        %s1113 = scalar_lea.vmem %s3, %s1112
        // Predicated region
        $region53: #{tpu_custom_call.1} parent=31 // pred_check
          %p1114 = pneg %p124
        $region54: #{tpu_custom_call.1} parent=31 // pred_check_branch
          %1116 = sbr.rel (%p1114) target = $region56
        $region55: #{tpu_custom_call.1} parent=31 // pred_region
          %s1117 = smul.u32 16, %s20
        $region56: #{tpu_custom_call.1} parent=31 // pred_fallthru
          _
        // Predicated region
        $region57: #{tpu_custom_call.1} parent=31 // pred_check
          %p1118 = pneg %p124
        $region58: #{tpu_custom_call.1} parent=31 // pred_check_branch
          %1120 = sbr.rel (%p1118) target = $region60
        $region59: #{tpu_custom_call.1} parent=31 // pred_region
          %s1121 = smul.u32 16, %s20
          %p1122 = scmp.lt.s32.totalorder %s1121, 15
          %s1123 = scalar_select %p1122, %s1121, 15
          %s1124 = smul.addr %s1123, 8
          %s1125 = scalar_lea.vmem %s3, %s1124
        $region60: #{tpu_custom_call.1} parent=31 // pred_fallthru
          _
      $region32: #{tpu_custom_call.1} parent=5 // pred_fallthru
        _
      %p1126 = scmp.le.s32.totalorder 2, %s11
      // Predicated region
      $region61: #{tpu_custom_call.1} parent=5 // pred_check
        %p1127 = pneg %p1126
      $region62: #{tpu_custom_call.1} parent=5 // pred_check_branch
        %1129 = sbr.rel (%p1127) target = $region64
      $region63: #{tpu_custom_call.1} parent=5 // pred_region
        %s1130 = ssub.s32 %s11, 2
      $region64: #{tpu_custom_call.1} parent=5 // pred_fallthru
        _
    $region6: #{tpu_custom_call.1} parent=1 // loop_footer
      %s15 = sadd.s32 1, %s11
    $region7: #{tpu_custom_call.1} parent=1 // loop_footer_branch
      %10 = sbr.rel target = $region3
    $region8: #{tpu_custom_call.1} parent=1 // loop_exit
      _
    %1131 = vsyncpa [#allocation5], 1
    %s1132 = scalar_lea.sflag [#allocation5], 1
    %1133 = vsyncpa %s1132, 1
    %1134 = vsyncpa [#allocation7], 1

</llo_original>
